<compile_context>
chip_gen: v7x
topology: tpu7x:2x2x1
jax: 0.10.0
libtpu: 0.0.40
codegen_flags: <defaults>
</compile_context>

<pallas_src>
import functools

import jax
import jax.numpy as jnp
from jax import lax
from jax.experimental import pallas as pl
from jax.experimental.pallas import tpu as pltpu

ALPHA = 1.0
GAMMA = 2.0

LANES = 128
MAX_TILE_ROWS = 4096   # 4096*128*4B = 2 MiB per f32 input buffer (x2 inputs x2 bufs = 8 MiB)
NUM_SPLITS = 2         # leading "parallel" axis -> both TCs on v7x; harmless on 1-TC chips


def _cdiv(a, b):
    return -(-a // b)


def _focal_kernel(x_ref, t_ref, out_ref, acc_ref, *, alpha, gamma,
                  tiles_per_split, total_elems, needs_mask):
    t = pl.program_id(1)

    @pl.when(t == 0)
    def _init():
        acc_ref[...] = jnp.zeros_like(acc_ref)

    tile_rows, lanes = x_ref.shape
    x = x_ref[...].astype(jnp.float32)
    z = t_ref[...].astype(jnp.float32)

    # Numerically stable BCE-with-logits (matches torch.nn.BCEWithLogitsLoss):
    #   bce = max(x, 0) - x * z + log(1 + exp(-|x|))
    e = jnp.exp(-jnp.abs(x))
    bce = jnp.maximum(x, 0.0) - x * z + jnp.log1p(e)
    pt = jnp.exp(-bce)
    one_m_pt = 1.0 - pt

    # Integer gamma -> repeated multiply (avoids pow -> exp(g*log(.)) on the EUP
    # and the log(0) edge case at pt == 1). Falls back to ** for general gamma.
    g = float(gamma)
    if g.is_integer() and 0 <= g <= 8:
        gi = int(g)
        if gi == 0:
            focal = jnp.ones_like(one_m_pt)
        else:
            focal = one_m_pt
            for _ in range(gi - 1):
                focal = focal * one_m_pt
    else:
        # Clamp: rounding can make bce slightly negative -> one_m_pt < 0 -> NaN under pow.
        focal = jnp.maximum(one_m_pt, 0.0) ** g

    contrib = (alpha * focal) * bce

    if needs_mask:
        # Mask out everything past the true element count: the lane-alignment
        # pad, the partial last tile, and any clamped/duplicated overshoot tile.
        # Uses the UNCLAMPED logical block index so duplicates contribute zero.
        block = pl.program_id(0) * tiles_per_split + t
        row0 = block * tile_rows
        rid = lax.broadcasted_iota(jnp.int32, (tile_rows, lanes), 0) + row0
        cid = lax.broadcasted_iota(jnp.int32, (tile_rows, lanes), 1)
        elem = rid * lanes + cid
        contrib = jnp.where(elem < total_elems, contrib, 0.0)

    # Reduce (tile_rows, 128) -> (8, 128) with sublane-aligned vreg adds only;
    # defer the single cross-lane reduce to finalize.
    r8 = (tile_rows // 8) * 8
    if r8:
        acc_ref[...] += contrib[:r8].reshape(r8 // 8, 8, lanes).sum(axis=0)
    rem = tile_rows - r8
    if rem:
        acc_ref[0:rem, :] += contrib[r8:, :]

    @pl.when(t == pl.num_programs(1) - 1)
    def _finalize():
        out_ref[0, 0] = jnp.sum(acc_ref[...])


def focal_loss(inputs, targets, alpha=ALPHA, gamma=GAMMA,
               max_tile_rows=MAX_TILE_ROWS):
    """Pallas TPU focal loss. inputs/targets: same shape (any), logits/labels.

    Inputs stream in their native dtype (f32/bf16/...); casting to f32 happens
    inside the kernel, so HBM traffic is itemsize bytes/element per array.
    """
    assert inputs.shape == targets.shape
    total = int(inputs.size)
    assert total > 0

    x = inputs.reshape(-1)   # free (no copy) for contiguous arrays
    z = targets.reshape(-1)

    rows = _cdiv(total, LANES)
    lane_pad = rows * LANES - total
    if lane_pad:
        # Only when numel % 128 != 0; value is irrelevant (masked in-kernel).
        x = jnp.pad(x, (0, lane_pad))
        z = jnp.pad(z, (0, lane_pad))
    x2d = x.reshape(rows, LANES)
    z2d = z.reshape(rows, LANES)

    if rows <= max_tile_rows:
        tile_rows = rows          # block == full dim: legal for any dtype/row count
    else:
        tile_rows = max_tile_rows  # multiple of 32: legal sublane packing f32/bf16/int8

    tiles_total = _cdiv(rows, tile_rows)
    num_splits = min(NUM_SPLITS, tiles_total)
    tiles_per_split = _cdiv(tiles_total, num_splits)
    last_block = tiles_total - 1

    # Masking is needed iff the grid covers more elements than `total`.
    needs_mask = (lane_pad != 0) or (num_splits * tiles_per_split * tile_rows != rows)

    def in_index(p, t):
        # Clamp so no block is fully out of bounds; duplicates are masked to 0
        # in-kernel via the unclamped logical index.
        return (jnp.minimum(p * tiles_per_split + t, last_block), 0)

    kernel = functools.partial(
        _focal_kernel,
        alpha=float(alpha), gamma=float(gamma),
        tiles_per_split=tiles_per_split,
        total_elems=total,
        needs_mask=needs_mask)

    bytes_in = rows * LANES * (x2d.dtype.itemsize + z2d.dtype.itemsize)

    # TODO(synk): on v7x, verify the leading "parallel" axis actually shards
    # across both TensorCores; if not, switch to CORE_PARALLEL / pl.core_map.
    partials = pl.pallas_call(
        kernel,
        out_shape=jax.ShapeDtypeStruct((num_splits, 1), jnp.float32),
        grid_spec=pltpu.PrefetchScalarGridSpec(
            num_scalar_prefetch=0,
            grid=(num_splits, tiles_per_split),
            in_specs=[
                pl.BlockSpec((tile_rows, LANES), in_index),
                pl.BlockSpec((tile_rows, LANES), in_index),
            ],
            out_specs=pl.BlockSpec((1, 1), lambda p, t: (p, 0),
                                   memory_space=pltpu.SMEM),
            scratch_shapes=[pltpu.VMEM((8, LANES), jnp.float32)],
        ),
        compiler_params=pltpu.CompilerParams(
            dimension_semantics=("parallel", "arbitrary"),
            # 8 MiB double-buffered inputs + elementwise temporaries; 48 MiB is
            # a comfortable cap on v5e/v6e (128 MiB) and below v7x's 64 MiB.
            vmem_limit_bytes=48 * 1024 * 1024,
        ),
        cost_estimate=pl.CostEstimate(
            flops=12 * rows * LANES,
            transcendentals=3 * rows * LANES,
            bytes_accessed=bytes_in + 4 * num_splits,
        ),
    )(x2d, z2d)

    return jnp.sum(partials) * jnp.float32(1.0 / total)


def focal_loss_ref(inputs, targets, alpha=ALPHA, gamma=GAMMA):
    x = inputs.astype(jnp.float32)
    z = targets.astype(jnp.float32)
    bce = jnp.maximum(x, 0.0) - x * z + jnp.log1p(jnp.exp(-jnp.abs(x)))
    pt = jnp.exp(-bce)
    return jnp.mean(alpha * (1.0 - pt) ** gamma * bce)


def _check(inputs, targets, name, **kw):
    out = jax.block_until_ready(focal_loss(inputs, targets, **kw))
    ref = focal_loss_ref(inputs, targets)
    assert jnp.allclose(out, ref, rtol=1e-5, atol=1e-6), (name, out, ref)


if __name__ == "__main__":
    key = jax.random.PRNGKey(0)
    k1, k2, k3, k4 = jax.random.split(key, 4)

    # 1) NCHW-style small shape: batch=2, channels=4, spatial=16x16 (f32 logits)
    shape = (2, 4, 16, 16)
    inputs = jax.random.normal(k1, shape, dtype=jnp.float32)             # logits
    targets = (jax.random.uniform(k2, shape) > 0.5).astype(jnp.float32)  # {0,1}
    _check(inputs, targets, "main")

    # 2) Ragged size (numel % 128 != 0): exercises lane pad + in-kernel mask.
    shape2 = (3, 5, 7)
    x2 = jax.random.normal(k3, shape2, dtype=jnp.float32)
    t2 = (jax.random.uniform(k4, shape2) > 0.5).astype(jnp.float32)
    _check(x2, t2, "ragged")

    # 3) Forced multi-tile / 2-split / clamped-overshoot path at small size.
    shape3 = (4, 19, 31)
    x3 = jax.random.normal(k1, shape3, dtype=jnp.float32)
    t3 = (jax.random.uniform(k2, shape3) > 0.5).astype(jnp.float32)
    _check(x3, t3, "multi_tile", max_tile_rows=8)

    # 4) Native bf16 logits (no wrapper upcast; cast happens in-kernel).
    xb = inputs.astype(jnp.bfloat16)
    _check(xb, targets, "bf16")

    print("KERNEL_OK")
</pallas_src>

<mosaic_0001>
module attributes {stable_mosaic.version = 11 : i64} {
  func.func @_focal_kernel(%arg0: i32, %arg1: i32, %arg2: memref<16x128xf32, #tpu.memory_space<vmem>>, %arg3: memref<16x128xf32, #tpu.memory_space<vmem>>, %arg4: memref<1x1xf32, #tpu.memory_space<smem>>, %arg5: memref<8x128xf32, #tpu.memory_space<vmem>>) attributes {dimension_semantics = [#tpu.dimension_semantics<parallel>, #tpu.dimension_semantics<arbitrary>], iteration_bounds = array<i64: 1, 1>, scalar_prefetch = 0 : i64, scratch_operands = 1 : i64, tpu.core_type = #tpu.core_type<tc>, window_params = [{transform_indices = @transform_0, window_bounds = array<i64: 16, 128>}, {transform_indices = @transform_1, window_bounds = array<i64: 16, 128>}, {transform_indices = @transform_2, window_bounds = array<i64: 1, 1>}]} {
    %c0_i32 = arith.constant 0 : i32
    %0 = arith.cmpi eq, %arg1, %c0_i32 : i32
    %1 = arith.extui %0 : i1 to i32
    %c0_i32_0 = arith.constant 0 : i32
    %2 = arith.cmpi ne, %1, %c0_i32_0 : i32
    scf.if %2 {
      %cst_15 = arith.constant 0.000000e+00 : f32
      %32 = vector.broadcast %cst_15 : f32 to vector<8x128xf32>
      %c0_16 = arith.constant 0 : index
      %c0_17 = arith.constant 0 : index
      %33 = vector.load %arg5[%c0_16, %c0_17] : memref<8x128xf32, #tpu.memory_space<vmem>>, vector<8x128xf32>
      tpu.vector_store %arg5[%c0_16, %c0_17], %32 {strides = array<i32>} : memref<8x128xf32, #tpu.memory_space<vmem>>, vector<8x128xf32>,
    } else {
    }
    %c0 = arith.constant 0 : index
    %c0_1 = arith.constant 0 : index
    %3 = vector.load %arg2[%c0, %c0_1] : memref<16x128xf32, #tpu.memory_space<vmem>>, vector<16x128xf32>
    %c0_2 = arith.constant 0 : index
    %c0_3 = arith.constant 0 : index
    %4 = vector.load %arg3[%c0_2, %c0_3] : memref<16x128xf32, #tpu.memory_space<vmem>>, vector<16x128xf32>
    %5 = math.absf %3 : vector<16x128xf32>
    %cst = arith.constant 0.000000e+00 : f32
    %6 = vector.broadcast %cst : f32 to vector<16x128xf32>
    %7 = arith.subf %6, %5 : vector<16x128xf32>
    %8 = math.exp %7 : vector<16x128xf32>
    %cst_4 = arith.constant 0.000000e+00 : f32
    %9 = vector.broadcast %cst_4 : f32 to vector<16x128xf32>
    %10 = arith.maximumf %3, %9 : vector<16x128xf32>
    %11 = arith.mulf %3, %4 : vector<16x128xf32>
    %12 = arith.subf %10, %11 : vector<16x128xf32>
    %13 = math.log1p %8 : vector<16x128xf32>
    %14 = arith.addf %12, %13 : vector<16x128xf32>
    %cst_5 = arith.constant 0.000000e+00 : f32
    %15 = vector.broadcast %cst_5 : f32 to vector<16x128xf32>
    %16 = arith.subf %15, %14 : vector<16x128xf32>
    %17 = math.exp %16 : vector<16x128xf32>
    %cst_6 = arith.constant 1.000000e+00 : f32
    %18 = vector.broadcast %cst_6 : f32 to vector<16x128xf32>
    %19 = arith.subf %18, %17 : vector<16x128xf32>
    %20 = arith.mulf %19, %19 : vector<16x128xf32>
    %cst_7 = arith.constant 1.000000e+00 : f32
    %21 = vector.broadcast %cst_7 : f32 to vector<16x128xf32>
    %22 = arith.mulf %21, %20 : vector<16x128xf32>
    %23 = arith.mulf %22, %14 : vector<16x128xf32>
    %c0_8 = arith.constant 0 : index
    %c0_9 = arith.constant 0 : index
    %24 = vector.load %arg5[%c0_8, %c0_9] : memref<8x128xf32, #tpu.memory_space<vmem>>, vector<8x128xf32>
    %25 = vector.shape_cast %23 : vector<16x128xf32> to vector<2x8x128xf32>
    %cst_10 = arith.constant dense<0.000000e+00> : vector<8x128xf32>
    %26 = vector.multi_reduction <add>, %25, %cst_10 [0] : vector<2x8x128xf32> to vector<8x128xf32>
    %27 = arith.addf %24, %26 : vector<8x128xf32>
    %c0_11 = arith.constant 0 : index
    %c0_12 = arith.constant 0 : index
    %28 = vector.load %arg5[%c0_11, %c0_12] : memref<8x128xf32, #tpu.memory_space<vmem>>, vector<8x128xf32>
    tpu.vector_store %arg5[%c0_11, %c0_12], %27 {strides = array<i32>} : memref<8x128xf32, #tpu.memory_space<vmem>>, vector<8x128xf32>,
    %c0_i32_13 = arith.constant 0 : i32
    %29 = arith.cmpi eq, %arg1, %c0_i32_13 : i32
    %30 = arith.extui %29 : i1 to i32
    %c0_i32_14 = arith.constant 0 : i32
    %31 = arith.cmpi ne, %30, %c0_i32_14 : i32
    scf.if %31 {
      %c0_15 = arith.constant 0 : index
      %c0_16 = arith.constant 0 : index
      %32 = vector.load %arg5[%c0_15, %c0_16] : memref<8x128xf32, #tpu.memory_space<vmem>>, vector<8x128xf32>
      %33 = vector.shape_cast %32 : vector<8x128xf32> to vector<1x8x128xf32>
      %cst_17 = arith.constant dense<0.000000e+00> : vector<1xf32>
      %34 = vector.multi_reduction <add>, %33, %cst_17 [1, 2] : vector<1x8x128xf32> to vector<1xf32>
      %35 = vector.shape_cast %34 : vector<1xf32> to vector<1x1x1xf32>
      %36 = vector.extract %35[0, 0, 0] : f32 from vector<1x1x1xf32>
      %c0_18 = arith.constant 0 : index
      %c0_19 = arith.constant 0 : index
      %37 = memref.load %arg4[%c0_18, %c0_19] : memref<1x1xf32, #tpu.memory_space<smem>>
      memref.store %36, %arg4[%c0_18, %c0_19] : memref<1x1xf32, #tpu.memory_space<smem>>
    } else {
    }
    return
  }
  func.func @transform_0(%arg0: i32, %arg1: i32) -> (i32, i32) {
    %c1_i32 = arith.constant 1 : i32
    %0 = arith.muli %arg0, %c1_i32 : i32
    %1 = arith.addi %0, %arg1 : i32
    %c0_i32 = arith.constant 0 : i32
    %2 = arith.minsi %1, %c0_i32 : i32
    %c0_i32_0 = arith.constant 0 : i32
    %c0_i32_1 = arith.constant 0 : i32
    return %2, %c0_i32_0 : i32, i32
  }
  func.func @transform_1(%arg0: i32, %arg1: i32) -> (i32, i32) {
    %c1_i32 = arith.constant 1 : i32
    %0 = arith.muli %arg0, %c1_i32 : i32
    %1 = arith.addi %0, %arg1 : i32
    %c0_i32 = arith.constant 0 : i32
    %2 = arith.minsi %1, %c0_i32 : i32
    %c0_i32_0 = arith.constant 0 : i32
    %c0_i32_1 = arith.constant 0 : i32
    return %2, %c0_i32_0 : i32, i32
  }
  func.func @transform_2(%arg0: i32, %arg1: i32) -> (i32, i32) {
    %c0_i32 = arith.constant 0 : i32
    %c0_i32_0 = arith.constant 0 : i32
    return %arg0, %c0_i32 : i32, i32
  }
}

</mosaic_0001>

<llo_original>
// kernel: tpu_custom_call.1
$region0: #{tpu_custom_call.1}
  #allocation0 [shape = 'u32[]', space=smem, size = 0x4, offset = 0x4, fixed_abs, tag = 'smem constant byte address 0x4 - core index']
  #allocation1 [shape = 'u32[144,128]{1,0:T(1,128)}', space=vmem, size = 0x12000, scoped, tag = 'internal scratch']
  #allocation2 [shape = 'f32[8,128]{1,0:T(8,128)}', space=vmem, size = 0x1000, scoped, tag = 'scratch operand']
  %s0 = inlined_call_operand.hbm [shape: f32[16,128], index: 0, kind: input, shape index: {}]
  %s1 = inlined_call_operand.hbm [shape: f32[16,128], index: 1, kind: input, shape index: {}]
  %s2 = inlined_call_operand.hbm [shape: f32[1,1], index: 2, kind: output, shape index: {}]
  %s3 = sld [smem:[#allocation0]]
  $region34: #{tpu_custom_call.1} parent=0
    _
  %s5 = ssub.s32 1, %s3
  %s6 = scalar_select 0, %s5, %s3
  $region1: #{tpu_custom_call.1} parent=0
    #allocation3 [shape = 'u8[8192]{0}', space=vmem, size = 0x2000, scoped, tag = 'input window, operand 0, single buffered']
    #allocation4 [shape = 's32[1]{0}', space=sflag, size = 0x4, scoped, tag = 'scoped memory for tpu_custom_call.1']
    #allocation5 [shape = 's32[1]{0}', space=sflag, size = 0x4, scoped, tag = 'scoped memory for tpu_custom_call.1']
    #allocation6 [shape = 'u8[8192]{0}', space=vmem, size = 0x2000, scoped, tag = 'input window, operand 1, single buffered']
    #allocation7 [shape = 's32[1]{0}', space=sflag, size = 0x4, scoped, tag = 'scoped memory for tpu_custom_call.1']
    #allocation8 [shape = 'u8[512]{0}', space=smem, size = 0x200, scoped, tag = 'output window, operand 0, single buffered']
    %7 = vsyncpa [#allocation4], 0
    %8 = vsyncpa [#allocation7], 0
    %9 = vsyncpa [#allocation5], 0
    // Predicated region
    $region2: #{tpu_custom_call.1} parent=1 // pred_check
      _
    $region3: #{tpu_custom_call.1} parent=1 // pred_check_branch
      %11 = sbr.rel (0) target = $region5
    $region4: #{tpu_custom_call.1} parent=1 // pred_region
      %s12 = sadd.s32 0, 0
      %p13 = scmp.lt.s32.totalorder %s12, 0
      %s14 = scalar_select %p13, %s12, 0
      %s15 = smul.u32 2, %s14
      %s17 = ssub.s32 256, 256
      %18 = vsyncadd [#allocation4], %s17
      %s19 = smul.addr %s15, 128
      %s20 = scalar_lea.hbm %s0, %s19
      %s21 = sshll.u32 [#allocation3], 4
      %s22 = int_to_ptr.vmem [resolvable:$true] %s21
      %27 = dma.hbm_to_vmem [thread:$0]  %s20, 256, %s22, [#allocation4], 128, 128, 8
    $region5: #{tpu_custom_call.1} parent=1 // pred_fallthru
      _
    // Predicated region
    $region6: #{tpu_custom_call.1} parent=1 // pred_check
      _
    $region7: #{tpu_custom_call.1} parent=1 // pred_check_branch
      %29 = sbr.rel (0) target = $region9
    $region8: #{tpu_custom_call.1} parent=1 // pred_region
      %s30 = sadd.s32 0, 0
      %p31 = scmp.lt.s32.totalorder %s30, 0
      %s32 = scalar_select %p31, %s30, 0
      %s33 = smul.u32 2, %s32
      %s35 = ssub.s32 256, 256
      %36 = vsyncadd [#allocation7], %s35
      %s37 = smul.addr %s33, 128
      %s38 = scalar_lea.hbm %s1, %s37
      %s39 = sshll.u32 [#allocation6], 4
      %s40 = int_to_ptr.vmem [resolvable:$true] %s39
      %45 = dma.hbm_to_vmem [thread:$0]  %s38, 256, %s40, [#allocation7], 128, 128, 8
    $region9: #{tpu_custom_call.1} parent=1 // pred_fallthru
      _
    // Predicated region
    $region10: #{tpu_custom_call.1} parent=1 // pred_check
      _
    $region11: #{tpu_custom_call.1} parent=1 // pred_check_branch
      %47 = sbr.rel (0) target = $region13
    $region12: #{tpu_custom_call.1} parent=1 // pred_region
      %48 = dma.done [#allocation4], 256
    $region13: #{tpu_custom_call.1} parent=1 // pred_fallthru
      _
    // Predicated region
    $region14: #{tpu_custom_call.1} parent=1 // pred_check
      _
    $region15: #{tpu_custom_call.1} parent=1 // pred_check_branch
      %50 = sbr.rel (0) target = $region17
    $region16: #{tpu_custom_call.1} parent=1 // pred_region
      %51 = dma.done [#allocation7], 256
    $region17: #{tpu_custom_call.1} parent=1 // pred_fallthru
      _
    %s52 = sadd.s32 0, 0
    %p53 = scmp.lt.s32.totalorder %s52, 0
    %s54 = scalar_select %p53, %s52, 0
    %s55 = smul.u32 2, %s54
    %s56 = sadd.s32 0, 0
    %p57 = scmp.lt.s32.totalorder %s56, 0
    %s58 = scalar_select %p57, %s56, 0
    %s59 = smul.u32 2, %s58
    %p60 = scmp.eq.s32.totalorder 0, 0
    // Predicated region
    $region18: #{tpu_custom_call.1} parent=1 // pred_check
      %p61 = pneg %p60
    $region19: #{tpu_custom_call.1} parent=1 // pred_check_branch
      %63 = sbr.rel (%p61) target = $region21
    $region20: #{tpu_custom_call.1} parent=1 // pred_region
      %64 = vst [vmem:[#allocation2] sm:$0xff] 0.0
    $region21: #{tpu_custom_call.1} parent=1 // pred_fallthru
      _
    %v65 = vld [vmem:[#allocation3] sm:$0xff]
    %v66 = vld [vmem:[#allocation3 + $0x8] sm:$0xff]
    %v67 = vld [vmem:[#allocation6] sm:$0xff]
    %v68 = vld [vmem:[#allocation6 + $0x8] sm:$0xff]
    %v69 = vand.u32 2147483647, %v65
    %v70 = vand.u32 2147483647, %v66
    %v71 = vsub.f32 0.0, %v69
    %v72 = vsub.f32 0.0, %v70
    %v73 = vmul.f32 %v71, 1.442695
    %v74 = vpow.pop %v73
    %v75 = vmul.f32 %v72, 1.442695
    %v76 = vpow.pop %v75
    %v77 = vmax.f32 %v65, 0.0
    %v78 = vmax.f32 %v66, 0.0
    %v79 = vmul.f32 %v65, %v67
    %v80 = vmul.f32 %v66, %v68
    %v81 = vsub.f32 %v77, %v79
    %v82 = vsub.f32 %v78, %v80
    %v83 = vadd.f32 %v74, 1.0
    %v84 = vlog2.pop %v83
    %v85 = vmul.f32 %v84, 0.6931472
    %v86 = vmul.f32 -0.5, %v74
    %v87 = vadd.f32 %v86, 1.0
    %v88 = vmul.f32 %v87, %v74
    %v89 = vand.u32 2147483647, %v74
    %vm90 = vcmp.lt.f32.partialorder %v89, 0.0004427343
    %v91 = vsel %vm90, %v88, %v85
    %v92 = vadd.f32 %v76, 1.0
    %v93 = vlog2.pop %v92
    %v94 = vmul.f32 %v93, 0.6931472
    %v95 = vmul.f32 -0.5, %v76
    %v96 = vadd.f32 %v95, 1.0
    %v97 = vmul.f32 %v96, %v76
    %v98 = vand.u32 2147483647, %v76
    %vm99 = vcmp.lt.f32.partialorder %v98, 0.0004427343
    %v100 = vsel %vm99, %v97, %v94
    %v101 = vadd.f32 %v81, %v91
    %v102 = vadd.f32 %v82, %v100
    %v103 = vsub.f32 0.0, %v101
    %v104 = vsub.f32 0.0, %v102
    %v105 = vmul.f32 %v103, 1.442695
    %v106 = vpow.pop %v105
    %v107 = vmul.f32 %v104, 1.442695
    %v108 = vpow.pop %v107
    %v109 = vsub.f32 1.0, %v106
    %v110 = vsub.f32 1.0, %v108
    %v111 = vmul.f32 %v109, %v109
    %v112 = vmul.f32 %v110, %v110
    %v113 = vmul.f32 %v111, %v101
    %v114 = vmul.f32 %v112, %v102
    %v115 = vld [vmem:[#allocation2] sm:$0xff]
    %v116 = vadd.f32 %v113, %v114
    %v117 = vadd.f32 %v115, %v116
    %118 = vst [vmem:[#allocation2] sm:$0xff] %v117
    // Predicated region
    $region22: #{tpu_custom_call.1} parent=1 // pred_check
      %p119 = pneg %p60
    $region23: #{tpu_custom_call.1} parent=1 // pred_check_branch
      %121 = sbr.rel (%p119) target = $region25
    $region24: #{tpu_custom_call.1} parent=1 // pred_region
      %v122 = vld [vmem:[#allocation2] sm:$0xff]
      %123 = vadd.xlane.f32.xlu0 %v122
      %v124 = vpop.xlane.xlu0 %123
      %v125 = vrot.slane %v124, 4
      %v126 = vadd.f32 %v124, %v125
      %v127 = vrot.slane %v126, 2
      %v128 = vadd.f32 %v126, %v127
      %v129 = vrot.slane %v128, 1
      %v130 = vadd.f32 %v128, %v129
      %s131 = vtos %v130
      %s132 = scalar_lea.smem [#allocation8], 0
      %133 = sst [smem:[%s132]] %s131
    $region25: #{tpu_custom_call.1} parent=1 // pred_fallthru
      _
    // Predicated region
    $region26: #{tpu_custom_call.1} parent=1 // pred_check
      _
    $region27: #{tpu_custom_call.1} parent=1 // pred_check_branch
      %135 = sbr.rel (0) target = $region29
    $region28: #{tpu_custom_call.1} parent=1 // pred_region
      %s137 = ssub.s32 16, 16
      %138 = vsyncadd [#allocation5], %s137
      %141 = dma.smem_to_hbm [#allocation8], 16, %s2, [#allocation5]
    $region29: #{tpu_custom_call.1} parent=1 // pred_fallthru
      _
    // Predicated region
    $region30: #{tpu_custom_call.1} parent=1 // pred_check
      _
    $region31: #{tpu_custom_call.1} parent=1 // pred_check_branch
      %143 = sbr.rel (0) target = $region33
    $region32: #{tpu_custom_call.1} parent=1 // pred_region
      %144 = dma.done [#allocation5], 16
    $region33: #{tpu_custom_call.1} parent=1 // pred_fallthru
      _
    %145 = sfence
    %146 = vsyncpa [#allocation4], 1
    %147 = vsyncpa [#allocation7], 1
    %148 = vsyncpa [#allocation5], 1

</llo_original>
